<compile_context>
chip_gen: v6e
topology: v6e:2x2x1
jax: 0.10.0
libtpu: 0.0.40
codegen_flags: <defaults>
</compile_context>

<pallas_src>
import math

import jax
import jax.numpy as jnp
import numpy as np
from jax.experimental import pallas as pl
from jax.experimental.pallas import tpu as pltpu

_INV_SQRT2 = 1.0 / math.sqrt(2.0)


def _round_up(x, m):
    return ((x + m - 1) // m) * m


def _vmem_capacity_bytes():
    """Physical VMEM of the current chip; conservative (v7x) fallback."""
    try:
        info = pltpu.get_tpu_info()
        for attr in ("vmem_capacity_bytes", "vmem_size_bytes", "vmem_bytes"):
            v = getattr(info, attr, None)
            if v:
                return int(v)
    except Exception:
        pass
    return 64 * 1024 * 1024


def _choose_tb(B):
    """Batch tile: multiple of 16 (bf16 packing); >=2 tiles when B allows (v7x
    megacore); 256-row tiles for large batches (fills the 256x256 MXU on v6e/v7x)."""
    b16 = _round_up(B, 16)
    if b16 <= 16:
        return 16
    if b16 < 512:
        return min(128, _round_up((b16 + 1) // 2, 16))
    return 256


def _head_kernel(x_ref, w1_ref, b1_ref, w2_ref, b2_ref, o_ref):
    """One (batch-tile i, hidden-slice k) step of the fused two-layer head.

      o[i] += GELU(x[i] @ W1[:, k_slice] + b1[k_slice]) @ W2[k_slice, :]   (+ b2 at k==0)

    When the whole (padded) hidden dim fits in VMEM the k axis has length 1 and the
    weight block indices are constant, so W1/W2/b1/b2 stay resident across batch tiles.
    Partial sums accumulate directly into the f32 output block (resident across k).
    """
    k = pl.program_id(1)

    # layer-1 slice: [TB, dim] @ [dim, TK] -> [TB, TK], f32 accumulation on the MXU
    h = jnp.dot(x_ref[...], w1_ref[...],
                preferred_element_type=jnp.float32) + b1_ref[...]

    # dropout(0.5) in eval mode -> identity
    # exact erf GELU (torch.nn.GELU default), kept in f32
    h = 0.5 * h * (1.0 + jax.lax.erf(h * _INV_SQRT2))

    # layer-2 partial: [TB, TK] @ [TK, Np] in bf16 operands, f32 accumulation
    part = jnp.dot(h.astype(w2_ref.dtype), w2_ref[...],
                   preferred_element_type=jnp.float32)

    @pl.when(k == 0)
    def _first():
        o_ref[...] = (part + b2_ref[...]).astype(o_ref.dtype)

    @pl.when(k > 0)
    def _rest():
        o_ref[...] += part.astype(o_ref.dtype)


def prepare_exist_classifier_params(raw, ths=0.5, *, matmul_dtype=jnp.bfloat16):
    """One-time (parameter-load time) preprocessing: fold the deterministic masks into
    the weights (logit trick -- no sigmoids), cast matmul operands to bf16, pick the
    hidden-slice size TK from the chip's VMEM budget, and pad to lane/sublane-dense
    shapes.  Call once and reuse across forward calls."""
    assert 0.0 < float(ths) < 1.0
    dim, mlp_dim = raw["w1_t"].shape
    num_classes = raw["w2_t"].shape[1]

    # sigmoid(m) > ths  <=>  m > logit(ths)  (sigmoid is monotonic)
    logit_ths = float(math.log(ths / (1.0 - ths)))
    eff_w1 = jnp.where(raw["wm1_t"] > logit_ths, raw["w1_t"], 0.0).astype(matmul_dtype)
    eff_b1 = jnp.where(raw["bm1"] > logit_ths, raw["b1"], 0.0).astype(jnp.float32)
    eff_w2 = jnp.where(raw["wm2_t"] > logit_ths, raw["w2_t"], 0.0).astype(matmul_dtype)
    eff_b2 = jnp.where(raw["bm2"] > logit_ths, raw["b2"], 0.0).astype(jnp.float32)

    np_pad = _round_up(num_classes, 128)     # lane-dense output (unmasked vst)
    mlp128 = _round_up(mlp_dim, 128)

    # VMEM budget (per generation): physical minus headroom, capped.
    vmem_cap = _vmem_capacity_bytes()
    vmem_limit = min(vmem_cap - 8 * 1024 * 1024, 112 * 1024 * 1024)
    budget = int(0.85 * vmem_limit)

    # Footprint estimate for one k-slice of width tk (2x for double-buffering,
    # worst-case TB=256 batch tile, + f32 intermediate activation).
    def _fits(tk, tb=256):
        need = (2 * tb * dim * 2          # x tiles (bf16)
                + 2 * dim * tk * 2        # W1 slice (bf16)
                + 2 * tk * 4              # b1 slice (f32)
                + 2 * tk * np_pad * 2     # W2 slice (bf16)
                + 2 * np_pad * 4          # b2 (f32)
                + 2 * tb * np_pad * 4     # output tiles (f32)
                + tb * tk * 4)            # intermediate GELU activations (f32)
        return need <= budget

    # Prefer the whole hidden dim resident; otherwise the largest power-of-two slice.
    tk = mlp128
    if not _fits(tk):
        tk = 128
        for cand in (2048, 1024, 512, 256, 128):
            if cand <= mlp128 and _fits(cand):
                tk = cand
                break
    mlp_pad = _round_up(mlp_dim, tk)

    eff_w1 = jnp.pad(eff_w1, ((0, 0), (0, mlp_pad - mlp_dim)))
    eff_b1 = jnp.pad(eff_b1, ((0, 0), (0, mlp_pad - mlp_dim)))
    eff_w2 = jnp.pad(eff_w2, ((0, mlp_pad - mlp_dim), (0, np_pad - num_classes)))
    eff_b2 = jnp.pad(eff_b2, ((0, 0), (0, np_pad - num_classes)))

    return dict(w1=eff_w1, b1=eff_b1, w2=eff_w2, b2=eff_b2,
                dim=dim, mlp_dim=mlp_dim, num_classes=num_classes,
                mlp_pad=mlp_pad, np_pad=np_pad, tk=tk,
                vmem_limit=int(vmem_limit), matmul_dtype=matmul_dtype)


def exist_classifier_forward(x, prep):
    """x: [B, dim] float32.  prep: output of prepare_exist_classifier_params."""
    B, dim = x.shape
    assert dim == prep["dim"], (dim, prep["dim"])

    TB = _choose_tb(B)
    B_pad = _round_up(B, TB)
    TK, mlp_pad, Np = prep["tk"], prep["mlp_pad"], prep["np_pad"]
    nk = mlp_pad // TK

    x_mm = x.astype(prep["matmul_dtype"])
    if B_pad != B:
        x_mm = jnp.pad(x_mm, ((0, B_pad - B), (0, 0)))

    # Weight slices: constant block index when nk == 1 (VMEM-resident across batch
    # tiles); deeper buffering for the k-tiled fallback to hide the slice DMA.
    if nk > 1:
        w1_spec = pl.BlockSpec((dim, TK), lambda i, k: (0, k),
                               pipeline_mode=pl.Buffered(3))
        w2_spec = pl.BlockSpec((TK, Np), lambda i, k: (k, 0),
                               pipeline_mode=pl.Buffered(3))
    else:
        w1_spec = pl.BlockSpec((dim, TK), lambda i, k: (0, k))
        w2_spec = pl.BlockSpec((TK, Np), lambda i, k: (k, 0))

    out = pl.pallas_call(
        _head_kernel,
        out_shape=jax.ShapeDtypeStruct((B_pad, Np), jnp.float32),
        grid_spec=pltpu.PrefetchScalarGridSpec(
            num_scalar_prefetch=0,
            grid=(B_pad // TB, nk),
            in_specs=[
                pl.BlockSpec((TB, dim), lambda i, k: (i, 0)),   # x tile
                w1_spec,                                        # W1 column slice
                pl.BlockSpec((1, TK), lambda i, k: (0, k)),     # b1 slice
                w2_spec,                                        # W2 row slice
                pl.BlockSpec((1, Np), lambda i, k: (0, 0)),     # b2
            ],
            out_specs=pl.BlockSpec((TB, Np), lambda i, k: (i, 0)),
        ),
        compiler_params=pltpu.CompilerParams(
            dimension_semantics=("parallel", "arbitrary"),
            vmem_limit_bytes=prep["vmem_limit"],
        ),
    )(x_mm, prep["w1"], prep["b1"], prep["w2"], prep["b2"])

    return out[:B, :prep["num_classes"]]


def init_params(key, dim, mlp_dim, num_classes):
    """Deterministic synthetic init matching MaskedLinear __init__ shapes.

    weight ~ choice({-c, +c}) with c = e * sqrt(1/in_features); mask ~ N(0,1).
    Stored transposed ([in, out]) for the x @ W kernel layout.
    """
    ks = jax.random.split(key, 8)

    c1 = np.e * math.sqrt(1.0 / dim)
    c2 = np.e * math.sqrt(1.0 / mlp_dim)

    sign = lambda k, shape: jnp.where(
        jax.random.bernoulli(k, 0.5, shape), 1.0, -1.0).astype(jnp.float32)

    w1_t = c1 * sign(ks[0], (dim, mlp_dim))
    wm1_t = jax.random.normal(ks[1], (dim, mlp_dim), jnp.float32)
    b1 = c1 * sign(ks[2], (1, mlp_dim))
    bm1 = jax.random.normal(ks[3], (1, mlp_dim), jnp.float32)

    w2_t = c2 * sign(ks[4], (mlp_dim, num_classes))
    wm2_t = jax.random.normal(ks[5], (mlp_dim, num_classes), jnp.float32)
    b2 = c2 * sign(ks[6], (1, num_classes))
    bm2 = jax.random.normal(ks[7], (1, num_classes), jnp.float32)

    return dict(w1_t=w1_t, wm1_t=wm1_t, b1=b1, bm1=bm1,
                w2_t=w2_t, wm2_t=wm2_t, b2=b2, bm2=bm2)


def _reference(x, p, ths):
    """Pure-JAX f32 reference of the deterministic MaskedLinear/GELU semantics."""
    g1 = (jax.nn.sigmoid(p["wm1_t"]) > ths).astype(jnp.float32)
    gb1 = (jax.nn.sigmoid(p["bm1"]) > ths).astype(jnp.float32)
    h = x @ (g1 * p["w1_t"]) + gb1 * p["b1"]
    h = 0.5 * h * (1.0 + jax.lax.erf(h / jnp.sqrt(2.0)))
    g2 = (jax.nn.sigmoid(p["wm2_t"]) > ths).astype(jnp.float32)
    gb2 = (jax.nn.sigmoid(p["bm2"]) > ths).astype(jnp.float32)
    return h @ (g2 * p["w2_t"]) + gb2 * p["b2"]


if __name__ == "__main__":
    key = jax.random.PRNGKey(0)
    k_x, k_p = jax.random.split(key)

    B, DIM, MLP_DIM, NUM_CLASSES = 2, 32, 64, 8
    x = jax.random.normal(k_x, (B, DIM), dtype=jnp.float32)
    params = init_params(k_p, DIM, MLP_DIM, NUM_CLASSES)

    # One-time param prep (mask fold + bf16 cast + padding), reused across calls.
    prep = prepare_exist_classifier_params(params, ths=0.5)

    out = exist_classifier_forward(x, prep)
    out = jax.block_until_ready(out)
    assert out.shape == (B, NUM_CLASSES)

    # bf16 matmul operands vs f32 reference -> loosened tolerance.
    ref = _reference(x, params, 0.5)
    np.testing.assert_allclose(np.asarray(out), np.asarray(ref),
                               rtol=5e-2, atol=1e-1)

    print("KERNEL_OK")
</pallas_src>

<mosaic_0001>
module attributes {stable_mosaic.version = 11 : i64} {
  func.func @_head_kernel(%arg0: i32, %arg1: i32, %arg2: memref<16x32xbf16, #tpu.memory_space<vmem>>, %arg3: memref<32x128xbf16, #tpu.memory_space<vmem>>, %arg4: memref<1x128xf32, #tpu.memory_space<vmem>>, %arg5: memref<128x128xbf16, #tpu.memory_space<vmem>>, %arg6: memref<1x128xf32, #tpu.memory_space<vmem>>, %arg7: memref<16x128xf32, #tpu.memory_space<vmem>>) attributes {dimension_semantics = [#tpu.dimension_semantics<parallel>, #tpu.dimension_semantics<arbitrary>], iteration_bounds = array<i64: 1, 1>, scalar_prefetch = 0 : i64, scratch_operands = 0 : i64, tpu.core_type = #tpu.core_type<tc>, window_params = [{transform_indices = @transform_0, window_bounds = array<i64: 16, 32>}, {transform_indices = @transform_1, window_bounds = array<i64: 32, 128>}, {transform_indices = @transform_2, window_bounds = array<i64: 1, 128>}, {transform_indices = @transform_3, window_bounds = array<i64: 128, 128>}, {pipeline_mode = #tpu.pipeline_mode<synchronous>, transform_indices = @transform_4, window_bounds = array<i64: 1, 128>}, {transform_indices = @transform_5, window_bounds = array<i64: 16, 128>}]} {
    %c0 = arith.constant 0 : index
    %c0_0 = arith.constant 0 : index
    %0 = vector.load %arg2[%c0, %c0_0] : memref<16x32xbf16, #tpu.memory_space<vmem>>, vector<16x32xbf16>
    %c0_1 = arith.constant 0 : index
    %c0_2 = arith.constant 0 : index
    %1 = vector.load %arg3[%c0_1, %c0_2] : memref<32x128xbf16, #tpu.memory_space<vmem>>, vector<32x128xbf16>
    %cst = arith.constant dense<0.000000e+00> : vector<16x128xf32>
    %2 = tpu.matmul %0, %1, %cst {dimension_numbers = #tpu.dot_dimension_numbers<[1], [0], [0], [1], [0, 0, 1, 1], [], []>} : vector<16x32xbf16>, vector<32x128xbf16>, vector<16x128xf32> -> vector<16x128xf32>
    %c0_3 = arith.constant 0 : index
    %c0_4 = arith.constant 0 : index
    %3 = vector.load %arg4[%c0_3, %c0_4] : memref<1x128xf32, #tpu.memory_space<vmem>>, vector<1x128xf32>
    %4 = vector.broadcast %3 : vector<1x128xf32> to vector<16x128xf32>
    %5 = arith.addf %2, %4 : vector<16x128xf32>
    %cst_5 = arith.constant 5.000000e-01 : f32
    %6 = vector.broadcast %cst_5 : f32 to vector<16x128xf32>
    %7 = arith.mulf %6, %5 : vector<16x128xf32>
    %cst_6 = arith.constant 0.707106769 : f32
    %8 = vector.broadcast %cst_6 : f32 to vector<16x128xf32>
    %9 = arith.mulf %5, %8 : vector<16x128xf32>
    %10 = math.erf %9 : vector<16x128xf32>
    %cst_7 = arith.constant 1.000000e+00 : f32
    %11 = vector.broadcast %cst_7 : f32 to vector<16x128xf32>
    %12 = arith.addf %11, %10 : vector<16x128xf32>
    %13 = arith.mulf %7, %12 : vector<16x128xf32>
    %14 = arith.truncf %13 : vector<16x128xf32> to vector<16x128xbf16>
    %c0_8 = arith.constant 0 : index
    %c0_9 = arith.constant 0 : index
    %15 = vector.load %arg5[%c0_8, %c0_9] : memref<128x128xbf16, #tpu.memory_space<vmem>>, vector<128x128xbf16>
    %cst_10 = arith.constant dense<0.000000e+00> : vector<16x128xf32>
    %16 = tpu.matmul %14, %15, %cst_10 {dimension_numbers = #tpu.dot_dimension_numbers<[1], [0], [0], [1], [0, 0, 1, 1], [], []>} : vector<16x128xbf16>, vector<128x128xbf16>, vector<16x128xf32> -> vector<16x128xf32>
    %c0_i32 = arith.constant 0 : i32
    %17 = arith.cmpi eq, %arg1, %c0_i32 : i32
    %18 = arith.extui %17 : i1 to i32
    %c0_i32_11 = arith.constant 0 : i32
    %19 = arith.cmpi ne, %18, %c0_i32_11 : i32
    scf.if %19 {
      %c0_14 = arith.constant 0 : index
      %c0_15 = arith.constant 0 : index
      %23 = vector.load %arg6[%c0_14, %c0_15] : memref<1x128xf32, #tpu.memory_space<vmem>>, vector<1x128xf32>
      %24 = vector.broadcast %23 : vector<1x128xf32> to vector<16x128xf32>
      %25 = arith.addf %16, %24 : vector<16x128xf32>
      %c0_16 = arith.constant 0 : index
      %c0_17 = arith.constant 0 : index
      %26 = vector.load %arg7[%c0_16, %c0_17] : memref<16x128xf32, #tpu.memory_space<vmem>>, vector<16x128xf32>
      tpu.vector_store %arg7[%c0_16, %c0_17], %25 {strides = array<i32>} : memref<16x128xf32, #tpu.memory_space<vmem>>, vector<16x128xf32>,
    } else {
    }
    %c0_i32_12 = arith.constant 0 : i32
    %20 = arith.cmpi sgt, %arg1, %c0_i32_12 : i32
    %21 = arith.extui %20 : i1 to i32
    %c0_i32_13 = arith.constant 0 : i32
    %22 = arith.cmpi ne, %21, %c0_i32_13 : i32
    scf.if %22 {
      %c0_14 = arith.constant 0 : index
      %c0_15 = arith.constant 0 : index
      %23 = vector.load %arg7[%c0_14, %c0_15] : memref<16x128xf32, #tpu.memory_space<vmem>>, vector<16x128xf32>
      %24 = arith.addf %23, %16 : vector<16x128xf32>
      %c0_16 = arith.constant 0 : index
      %c0_17 = arith.constant 0 : index
      %25 = vector.load %arg7[%c0_16, %c0_17] : memref<16x128xf32, #tpu.memory_space<vmem>>, vector<16x128xf32>
      tpu.vector_store %arg7[%c0_16, %c0_17], %24 {strides = array<i32>} : memref<16x128xf32, #tpu.memory_space<vmem>>, vector<16x128xf32>,
    } else {
    }
    return
  }
  func.func @transform_0(%arg0: i32, %arg1: i32) -> (i32, i32) {
    %c0_i32 = arith.constant 0 : i32
    %c0_i32_0 = arith.constant 0 : i32
    return %arg0, %c0_i32 : i32, i32
  }
  func.func @transform_1(%arg0: i32, %arg1: i32) -> (i32, i32) {
    %c0_i32 = arith.constant 0 : i32
    %c0_i32_0 = arith.constant 0 : i32
    return %c0_i32, %arg1 : i32, i32
  }
  func.func @transform_2(%arg0: i32, %arg1: i32) -> (i32, i32) {
    %c0_i32 = arith.constant 0 : i32
    %c0_i32_0 = arith.constant 0 : i32
    return %c0_i32, %arg1 : i32, i32
  }
  func.func @transform_3(%arg0: i32, %arg1: i32) -> (i32, i32) {
    %c0_i32 = arith.constant 0 : i32
    %c0_i32_0 = arith.constant 0 : i32
    return %arg1, %c0_i32 : i32, i32
  }
  func.func @transform_4(%arg0: i32, %arg1: i32) -> (i32, i32) {
    %c0_i32 = arith.constant 0 : i32
    %c0_i32_0 = arith.constant 0 : i32
    %c0_i32_1 = arith.constant 0 : i32
    return %c0_i32, %c0_i32_0 : i32, i32
  }
  func.func @transform_5(%arg0: i32, %arg1: i32) -> (i32, i32) {
    %c0_i32 = arith.constant 0 : i32
    %c0_i32_0 = arith.constant 0 : i32
    return %arg0, %c0_i32 : i32, i32
  }
}

</mosaic_0001>

<llo_original>
// kernel: tpu_custom_call.1
$region0: #{tpu_custom_call.1}
  #allocation0 [shape = 'u32[]', space=smem, size = 0x4, offset = 0x4, fixed_abs, tag = 'smem constant byte address 0x4 - core index']
  #allocation1 [shape = 'u32[144,128]{1,0:T(1,128)}', space=vmem, size = 0x12000, scoped, tag = 'internal scratch']
  %s0 = inlined_call_operand.hbm [shape: bf16[16,32], index: 0, kind: input, shape index: {}]
  %s1 = inlined_call_operand.hbm [shape: bf16[32,128], index: 1, kind: input, shape index: {}]
  %s2 = inlined_call_operand.vmem [shape: f32[1,128], index: 2, kind: input, shape index: {}]
  %s3 = inlined_call_operand.hbm [shape: bf16[128,128], index: 3, kind: input, shape index: {}]
  %s4 = inlined_call_operand.vmem [shape: f32[1,128], index: 4, kind: input, shape index: {}]
  %s5 = inlined_call_operand.hbm [shape: f32[16,128], index: 5, kind: output, shape index: {}]
  %s6 = sld [smem:[#allocation0]]
  $region50: #{tpu_custom_call.1} parent=0
    _
  %s8 = ssub.s32 1, %s6
  %s9 = scalar_select 0, %s8, %s6
  $region1: #{tpu_custom_call.1} parent=0
    #allocation2 [shape = 'u8[4096]{0}', space=vmem, size = 0x1000, scoped, tag = 'input window, operand 0, single buffered']
    #allocation3 [shape = 's32[1]{0}', space=sflag, size = 0x4, scoped, tag = 'scoped memory for tpu_custom_call.1']
    #allocation4 [shape = 's32[1]{0}', space=sflag, size = 0x4, scoped, tag = 'scoped memory for tpu_custom_call.1']
    #allocation5 [shape = 'u8[8192]{0}', space=vmem, size = 0x2000, scoped, tag = 'input window, operand 1, single buffered']
    #allocation6 [shape = 's32[1]{0}', space=sflag, size = 0x4, scoped, tag = 'scoped memory for tpu_custom_call.1']
    #allocation7 [shape = 'u8[32768]{0}', space=vmem, size = 0x8000, scoped, tag = 'input window, operand 3, single buffered']
    #allocation8 [shape = 'u8[8192]{0}', space=vmem, size = 0x2000, scoped, tag = 'output window, operand 0, single buffered']
    %10 = vsyncpa [#allocation3], 0
    %11 = vsyncpa [#allocation6], 0
    %12 = vsyncpa [#allocation4], 0
    // Predicated region
    $region2: #{tpu_custom_call.1} parent=1 // pred_check
      _
    $region3: #{tpu_custom_call.1} parent=1 // pred_check_branch
      %14 = sbr.rel (0) target = $region5
    $region4: #{tpu_custom_call.1} parent=1 // pred_region
      %s16 = ssub.s32 128, 128
      %17 = vsyncadd [#allocation3], %s16
      %s18 = sshll.u32 [#allocation2], 4
      %s19 = int_to_ptr.vmem [resolvable:$true] %s18
      %24 = dma.hbm_to_vmem [thread:$0]  %s0, 128, %s19, [#allocation3], 64, 64, 4
    $region5: #{tpu_custom_call.1} parent=1 // pred_fallthru
      _
    // Predicated region
    $region6: #{tpu_custom_call.1} parent=1 // pred_check
      _
    $region7: #{tpu_custom_call.1} parent=1 // pred_check_branch
      %26 = sbr.rel (0) target = $region9
    $region8: #{tpu_custom_call.1} parent=1 // pred_region
      %s28 = ssub.s32 256, 256
      %29 = vsyncadd [#allocation6], %s28
      %s30 = sshll.u32 [#allocation5], 4
      %s31 = int_to_ptr.vmem [resolvable:$true] %s30
      %36 = dma.hbm_to_vmem [thread:$0]  %s1, 256, %s31, [#allocation6], 64, 64, 4
    $region9: #{tpu_custom_call.1} parent=1 // pred_fallthru
      _
    // Predicated region
    $region10: #{tpu_custom_call.1} parent=1 // pred_check
      _
    $region11: #{tpu_custom_call.1} parent=1 // pred_check_branch
      %38 = sbr.rel (0) target = $region13
    $region12: #{tpu_custom_call.1} parent=1 // pred_region
      _
    $region13: #{tpu_custom_call.1} parent=1 // pred_fallthru
      _
    // Predicated region
    $region14: #{tpu_custom_call.1} parent=1 // pred_check
      _
    $region15: #{tpu_custom_call.1} parent=1 // pred_check_branch
      %40 = sbr.rel (0) target = $region17
    $region16: #{tpu_custom_call.1} parent=1 // pred_region
      %s42 = ssub.s32 1024, 1024
      %43 = vsyncadd [#allocation6], %s42
      %s44 = sshll.u32 [#allocation7], 4
      %s45 = int_to_ptr.vmem [resolvable:$true] %s44
      %50 = dma.hbm_to_vmem [thread:$0]  %s3, 1024, %s45, [#allocation6], 64, 64, 4
    $region17: #{tpu_custom_call.1} parent=1 // pred_fallthru
      _
    // Predicated region
    $region18: #{tpu_custom_call.1} parent=1 // pred_check
      _
    $region19: #{tpu_custom_call.1} parent=1 // pred_check_branch
      %52 = sbr.rel (0) target = $region21
    $region20: #{tpu_custom_call.1} parent=1 // pred_region
      _
    $region21: #{tpu_custom_call.1} parent=1 // pred_fallthru
      _
    // Predicated region
    $region22: #{tpu_custom_call.1} parent=1 // pred_check
      _
    $region23: #{tpu_custom_call.1} parent=1 // pred_check_branch
      %54 = sbr.rel (0) target = $region25
    $region24: #{tpu_custom_call.1} parent=1 // pred_region
      %55 = dma.done [#allocation3], 128
    $region25: #{tpu_custom_call.1} parent=1 // pred_fallthru
      _
    // Predicated region
    $region26: #{tpu_custom_call.1} parent=1 // pred_check
      _
    $region27: #{tpu_custom_call.1} parent=1 // pred_check_branch
      %57 = sbr.rel (0) target = $region29
    $region28: #{tpu_custom_call.1} parent=1 // pred_region
      %58 = dma.done [#allocation6], 256
    $region29: #{tpu_custom_call.1} parent=1 // pred_fallthru
      _
    // Predicated region
    $region30: #{tpu_custom_call.1} parent=1 // pred_check
      _
    $region31: #{tpu_custom_call.1} parent=1 // pred_check_branch
      %60 = sbr.rel (0) target = $region33
    $region32: #{tpu_custom_call.1} parent=1 // pred_region
      %61 = dma.done [#allocation6], 1024
    $region33: #{tpu_custom_call.1} parent=1 // pred_fallthru
      _
    %v63 = vld [vmem:[#allocation2] sm:$0xf]
    %v64 = vld [vmem:[#allocation2 + $0x4] sm:$0xf]
    %v65 = vld [vmem:[#allocation5] sm:$0xf]
    %v66 = vld [vmem:[#allocation5 + $0x4] sm:$0xf]
    %v67 = vld [vmem:[#allocation5 + $0x8] sm:$0xf]
    %v68 = vld [vmem:[#allocation5 + $0xc] sm:$0xf]
    %v69 = vld [vmem:[%s2] sm:$0x1]
    %v71 = vlaneseq
    %v72 = vshrl.u32 %v71, 7
    %v73 = vsub.s32 0, %v72
    %v74 = vrot.slane %v69, %v73
    %v78 = vunpack.c.l.b16 %v63
    %v79 = vunpack.c.l.b16 %v64
    %v80 = vpack.c.b16 %v79, %v78
    %v85 = vunpack.c.l.b16 %v65
    %v86 = vunpack.c.l.b16 %v66
    %v87 = vunpack.c.l.b16 %v67
    %v88 = vunpack.c.l.b16 %v68
    %v89 = vpack.c.b16 %v86, %v85
    %v90 = vpack.c.b16 %v88, %v87
    %vm93 = vcmask 261120
    %v95 = vsel %vm93, %v80, 0
    %97 = vmatprep.subr.bf16.mxu0 0
    %98 = vmatpush1.bf16.msra.mxu0 0
    %99 = vmatprep.subr.bf16.mxu0 0
    %100 = vmatpush1.bf16.msra.mxu0 0
    %101 = vmatprep.subr.bf16.mxu0 0
    %102 = vmatpush1.bf16.msra.mxu0 0
    %103 = vmatprep.subr.bf16.mxu0 0
    %104 = vmatpush1.bf16.msra.mxu0 0
    %105 = vmatprep.subr.bf16.mxu0 0
    %106 = vmatpush1.bf16.msra.mxu0 0
    %107 = vmatprep.subr.bf16.mxu0 0
    %108 = vmatpush1.bf16.msra.mxu0 0
    %109 = vmatprep.subr.bf16.mxu0 0
    %110 = vmatpush1.bf16.msra.mxu0 %v90
    %111 = vmatprep.subr.bf16.mxu0 0
    %112 = vmatpush1.bf16.msra.mxu0 %v89
    %113 = vmatprep.subr.bf16.mxu0 0
    %114 = vmatpush2.bf16.msra.mxu0 0
    %115 = vmatprep.subr.bf16.mxu0 0
    %116 = vmatpush2.bf16.msra.mxu0 0
    %117 = vmatprep.subr.bf16.mxu0 0
    %118 = vmatpush2.bf16.msra.mxu0 0
    %119 = vmatprep.subr.bf16.mxu0 0
    %120 = vmatpush2.bf16.msra.mxu0 0
    %121 = vmatprep.subr.bf16.mxu0 0
    %122 = vmatpush2.bf16.msra.mxu0 0
    %123 = vmatprep.subr.bf16.mxu0 0
    %124 = vmatpush2.bf16.msra.mxu0 0
    %125 = vmatprep.subr.bf16.mxu0 0
    %126 = vmatpush2.bf16.msra.mxu0 0
    %127 = vmatprep.subr.bf16.mxu0 0
    %128 = vmatpush2.bf16.msra.mxu0 0
    %129 = vmatprep.mubr.bf16.mxu0 0
    %130 = vmatmul.mubr.bf16.gmra.mxu0 %v95
    %v131 = vpop.f32.mrf.mxu0
    %v132 = vadd.f32 %v74, %v131
    %v133 = vpop.f32.mrf.mxu0
    %v134 = vpop.f32.mrf.mxu0
    %v135 = vadd.f32 %v74, %v134
    %v136 = vpop.f32.mrf.mxu0
    %137 = vdwg.mxu0
    %v138 = vmul.f32 %v132, 0.5
    %v139 = vmul.f32 %v135, 0.5
    %v140 = vmul.f32 %v132, 0.70710677
    %v141 = vmul.f32 %v135, 0.70710677
    %v142 = verf.f32.pop %v140
    %v143 = verf.f32.pop %v141
    %v144 = vadd.f32 %v142, 1.0
    %v145 = vadd.f32 %v143, 1.0
    %v146 = vmul.f32 %v138, %v144
    %v147 = vmul.f32 %v139, %v145
    %v148 = vpack.c.bf16 %v147, %v146
    %v149 = vld [vmem:[#allocation7] sm:$0xf]
    %v150 = vld [vmem:[#allocation7 + $0x4] sm:$0xf]
    %v151 = vld [vmem:[#allocation7 + $0x8] sm:$0xf]
    %v152 = vld [vmem:[#allocation7 + $0xc] sm:$0xf]
    %v153 = vld [vmem:[#allocation7 + $0x10] sm:$0xf]
    %v154 = vld [vmem:[#allocation7 + $0x14] sm:$0xf]
    %v155 = vld [vmem:[#allocation7 + $0x18] sm:$0xf]
    %v156 = vld [vmem:[#allocation7 + $0x1c] sm:$0xf]
    %v157 = vld [vmem:[#allocation7 + $0x20] sm:$0xf]
    %v158 = vld [vmem:[#allocation7 + $0x24] sm:$0xf]
    %v159 = vld [vmem:[#allocation7 + $0x28] sm:$0xf]
    %v160 = vld [vmem:[#allocation7 + $0x2c] sm:$0xf]
    %v161 = vld [vmem:[#allocation7 + $0x30] sm:$0xf]
    %v162 = vld [vmem:[#allocation7 + $0x34] sm:$0xf]
    %v163 = vld [vmem:[#allocation7 + $0x38] sm:$0xf]
    %v164 = vld [vmem:[#allocation7 + $0x3c] sm:$0xf]
    %v181 = vunpack.c.l.b16 %v149
    %v182 = vunpack.c.l.b16 %v150
    %v183 = vunpack.c.l.b16 %v151
    %v184 = vunpack.c.l.b16 %v152
    %v185 = vunpack.c.l.b16 %v153
    %v186 = vunpack.c.l.b16 %v154
    %v187 = vunpack.c.l.b16 %v155
    %v188 = vunpack.c.l.b16 %v156
    %v189 = vunpack.c.l.b16 %v157
    %v190 = vunpack.c.l.b16 %v158
    %v191 = vunpack.c.l.b16 %v159
    %v192 = vunpack.c.l.b16 %v160
    %v193 = vunpack.c.l.b16 %v161
    %v194 = vunpack.c.l.b16 %v162
    %v195 = vunpack.c.l.b16 %v163
    %v196 = vunpack.c.l.b16 %v164
    %v197 = vpack.c.b16 %v182, %v181
    %v198 = vpack.c.b16 %v184, %v183
    %v199 = vpack.c.b16 %v186, %v185
    %v200 = vpack.c.b16 %v188, %v187
    %v201 = vpack.c.b16 %v190, %v189
    %v202 = vpack.c.b16 %v192, %v191
    %v203 = vpack.c.b16 %v194, %v193
    %v204 = vpack.c.b16 %v196, %v195
    %213 = vmatprep.subr.bf16.mxu0 0
    %214 = vmatpush1.bf16.msra.mxu0 %v204
    %215 = vmatprep.subr.bf16.mxu0 0
    %216 = vmatpush1.bf16.msra.mxu0 %v203
    %217 = vmatprep.subr.bf16.mxu0 0
    %218 = vmatpush1.bf16.msra.mxu0 %v202
    %219 = vmatprep.subr.bf16.mxu0 0
    %220 = vmatpush1.bf16.msra.mxu0 %v201
    %221 = vmatprep.subr.bf16.mxu0 0
    %222 = vmatpush1.bf16.msra.mxu0 %v200
    %223 = vmatprep.subr.bf16.mxu0 0
    %224 = vmatpush1.bf16.msra.mxu0 %v199
    %225 = vmatprep.subr.bf16.mxu0 0
    %226 = vmatpush1.bf16.msra.mxu0 %v198
    %227 = vmatprep.subr.bf16.mxu0 0
    %228 = vmatpush1.bf16.msra.mxu0 %v197
    %229 = vmatprep.subr.bf16.mxu0 0
    %230 = vmatpush2.bf16.msra.mxu0 0
    %231 = vmatprep.subr.bf16.mxu0 0
    %232 = vmatpush2.bf16.msra.mxu0 0
    %233 = vmatprep.subr.bf16.mxu0 0
    %234 = vmatpush2.bf16.msra.mxu0 0
    %235 = vmatprep.subr.bf16.mxu0 0
    %236 = vmatpush2.bf16.msra.mxu0 0
    %237 = vmatprep.subr.bf16.mxu0 0
    %238 = vmatpush2.bf16.msra.mxu0 0
    %239 = vmatprep.subr.bf16.mxu0 0
    %240 = vmatpush2.bf16.msra.mxu0 0
    %241 = vmatprep.subr.bf16.mxu0 0
    %242 = vmatpush2.bf16.msra.mxu0 0
    %243 = vmatprep.subr.bf16.mxu0 0
    %244 = vmatpush2.bf16.msra.mxu0 0
    %245 = vmatprep.mubr.bf16.mxu0 0
    %246 = vmatmul.mubr.bf16.gmra.mxu0 %v148
    %v247 = vpop.f32.mrf.mxu0
    %v248 = vadd.f32 0.0, %v247
    %v249 = vpop.f32.mrf.mxu0
    %v250 = vpop.f32.mrf.mxu0
    %v251 = vadd.f32 0.0, %v250
    %v252 = vpop.f32.mrf.mxu0
    %253 = vdwg.mxu0
    %p254 = scmp.eq.s32.totalorder 0, 0
    // Predicated region
    $region34: #{tpu_custom_call.1} parent=1 // pred_check
      %p255 = pneg %p254
    $region35: #{tpu_custom_call.1} parent=1 // pred_check_branch
      %257 = sbr.rel (%p255) target = $region37
    $region36: #{tpu_custom_call.1} parent=1 // pred_region
      %v258 = vld [vmem:[%s4] sm:$0x1]
      %v260 = vlaneseq
      %v261 = vshrl.u32 %v260, 7
      %v262 = vsub.s32 0, %v261
      %v263 = vrot.slane %v258, %v262
      %v265 = vadd.f32 %v248, %v263
      %v266 = vadd.f32 %v251, %v263
      %267 = vst [vmem:[#allocation8] sm:$0xff] %v265
      %268 = vst [vmem:[#allocation8 + $0x8] sm:$0xff] %v266
    $region37: #{tpu_custom_call.1} parent=1 // pred_fallthru
      _
    %p269 = scmp.gt.s32.totalorder 0, 0
    // Predicated region
    $region38: #{tpu_custom_call.1} parent=1 // pred_check
      %p270 = pneg %p269
    $region39: #{tpu_custom_call.1} parent=1 // pred_check_branch
      %272 = sbr.rel (%p270) target = $region41
    $region40: #{tpu_custom_call.1} parent=1 // pred_region
      %v273 = vld [vmem:[#allocation8] sm:$0xff]
      %v274 = vld [vmem:[#allocation8 + $0x8] sm:$0xff]
      %v275 = vadd.f32 %v273, %v248
      %v276 = vadd.f32 %v274, %v251
      %277 = vst [vmem:[#allocation8] sm:$0xff] %v275
      %278 = vst [vmem:[#allocation8 + $0x8] sm:$0xff] %v276
    $region41: #{tpu_custom_call.1} parent=1 // pred_fallthru
      _
    // Predicated region
    $region42: #{tpu_custom_call.1} parent=1 // pred_check
      _
    $region43: #{tpu_custom_call.1} parent=1 // pred_check_branch
      %280 = sbr.rel (0) target = $region45
    $region44: #{tpu_custom_call.1} parent=1 // pred_region
      %s282 = ssub.s32 256, 256
      %283 = vsyncadd [#allocation4], %s282
      %s284 = sshll.u32 [#allocation8], 4
      %s285 = int_to_ptr.vmem [resolvable:$true] %s284
      %290 = dma.vmem_to_hbm [thread:$0]  %s285, 256, %s5, [#allocation4], 128, 128, 8
    $region45: #{tpu_custom_call.1} parent=1 // pred_fallthru
      _
    // Predicated region
    $region46: #{tpu_custom_call.1} parent=1 // pred_check
      _
    $region47: #{tpu_custom_call.1} parent=1 // pred_check_branch
      %292 = sbr.rel (0) target = $region49
    $region48: #{tpu_custom_call.1} parent=1 // pred_region
      %293 = dma.done [#allocation4], 256
    $region49: #{tpu_custom_call.1} parent=1 // pred_fallthru
      _
    %294 = vsyncpa [#allocation3], 1
    %295 = vsyncpa [#allocation6], 1
    %296 = vsyncpa [#allocation4], 1

</llo_original>
